<compile_context>
chip_gen: v7x
topology: tpu7x:2x2x1
jax: 0.10.0
libtpu: 0.0.40
codegen_flags: <defaults>
</compile_context>

<pallas_src>
import jax
import jax.numpy as jnp
from jax.experimental import pallas as pl
from jax.experimental.pallas import tpu as pltpu

_VMEM_SPEC = pl.BlockSpec(memory_space=pltpu.MemorySpace.VMEM)
_LANE = 128
_SUBLANE = 8


# ------------------------------ helpers ------------------------------------

def _round_up(x, m):
    return ((x + m - 1) // m) * m


def _pad2(a, rows, cols):
    a = jnp.asarray(a, jnp.float32)
    return jnp.zeros((rows, cols), jnp.float32).at[:a.shape[0], :a.shape[1]].set(a)


def build_norm_adj(edge_index, n_src, n_dst):
    """Dense row-normalized adjacency A[dst, src]: mean aggregation src -> dst."""
    src, dst = edge_index[0], edge_index[1]
    adj = jnp.zeros((n_dst, n_src), jnp.float32).at[dst, src].add(1.0)
    deg = jnp.clip(jnp.sum(adj, axis=1, keepdims=True), 1.0, None)
    return adj / deg


# ------------------------------ fused kernel -------------------------------

def _make_kernel(fmp, fdp, hp, out_pad, offs):
    r_wxm, r_wxd, r_whm, r_whd, r_b, r_w2, r_b2 = offs

    def kernel(a_dm_ref, a_md_ref, x_m_ref, x_d_ref, sel_ref, w_ref, out_ref):
        f32 = jnp.float32
        x_m = x_m_ref[...]
        x_d = x_d_ref[...]
        a_dm = a_dm_ref[...]
        a_md = a_md_ref[...]

        bias = w_ref[r_b:r_b + 8, 0:hp]
        b1_md, b1_dm = bias[0:1, :], bias[1:2, :]
        b2_d, b2_m = bias[2:3, :], bias[3:4, :]

        # ---- encoder layer 1: one wide (2H-lane) matmul per node type, then
        #      mean-aggregation via the row-normalized adjacency on the MXU ----
        p_m = jnp.dot(x_m, w_ref[r_wxm:r_wxm + fmp, 0:2 * hp],
                      preferred_element_type=f32)
        p_d = jnp.dot(x_d, w_ref[r_wxd:r_wxd + fdp, 0:2 * hp],
                      preferred_element_type=f32)
        h_d = jnp.maximum(
            jnp.dot(a_dm, p_m[:, :hp], preferred_element_type=f32)
            + p_d[:, hp:] + b1_md, 0.0)
        h_m = jnp.maximum(
            jnp.dot(a_md, p_d[:, :hp], preferred_element_type=f32)
            + p_m[:, hp:] + b1_dm, 0.0)

        # ---- encoder layer 2, with the decoder's lin1 folded into the weights:
        #      these produce z_m @ Wd1m and z_d @ Wd1d directly ----
        q_m = jnp.dot(h_m, w_ref[r_whm:r_whm + hp, 0:2 * hp],
                      preferred_element_type=f32)
        q_d = jnp.dot(h_d, w_ref[r_whd:r_whd + hp, 0:2 * hp],
                      preferred_element_type=f32)
        z_d = jnp.dot(a_dm, q_m[:, :hp], preferred_element_type=f32) + q_d[:, hp:] + b2_d
        z_m = jnp.dot(a_md, q_d[:, :hp], preferred_element_type=f32) + q_m[:, hp:] + b2_m

        # ---- decoder: single merged one-hot gather+sum (VMEM resident), ReLU,
        #      lane-dense final linear ----
        z_all = jnp.concatenate([z_m, z_d], axis=0)           # (N_m + N_d, hp)
        h1 = jnp.maximum(jnp.dot(sel_ref[...], z_all, preferred_element_type=f32), 0.0)
        wd2 = w_ref[r_w2:r_w2 + hp, 0:out_pad]
        bd2 = w_ref[r_b2:r_b2 + 1, 0:out_pad]
        out_ref[...] = jnp.dot(h1, wd2, preferred_element_type=f32) + bd2

    return kernel


# ------------------------------- glue (JAX) --------------------------------

def model_forward(params, x_dict, edge_index_dict, edge_label_index):
    x_m = jnp.asarray(x_dict['microbes'], jnp.float32)
    x_d = jnp.asarray(x_dict['diseases'], jnp.float32)
    n_m, f_m = x_m.shape
    n_d, f_d = x_d.shape
    h = params['lin1']['w'].shape[0]
    out_features = params['lin2']['w'].shape[0]

    fmp, fdp, hp = _round_up(f_m, 8), _round_up(f_d, 8), _round_up(h, 8)
    out_pad = _round_up(out_features, _LANE)
    lane_w = max(_LANE, 2 * hp, out_pad)

    # ---- graph glue (compiled once under jit, fused with the weight folding) ----
    a_dm = build_norm_adj(edge_index_dict[('microbes', 'to', 'diseases')], n_m, n_d)
    a_md = build_norm_adj(edge_index_dict[('diseases', 'rev_to', 'microbes')], n_d, n_m)

    row, col = edge_label_index[0], edge_label_index[1]
    e = int(edge_label_index.shape[1])
    e_pad = max(_SUBLANE, _round_up(e, _SUBLANE))
    ar = jnp.arange(e)
    sel = (jnp.zeros((e_pad, n_m + n_d), jnp.float32)
           .at[ar, row].set(1.0)
           .at[ar, n_m + col].set(1.0))
    # TODO(synk): for large E, replace the dense one-hot gather with scalar-prefetched
    # row/col indices (PrefetchScalarGridSpec) and a per-edge-block gather.

    # ---- weight folding & packing into ONE contiguous slab ----
    wd1 = jnp.asarray(params['lin1']['w'], jnp.float32).T          # (2H, H)
    wd1m, wd1d = wd1[:h], wd1[h:]
    bd1 = jnp.asarray(params['lin1']['b'], jnp.float32)

    c1md, c1dm = params['conv1_md'], params['conv1_dm']
    c2md, c2dm = params['conv2_md'], params['conv2_dm']

    # layer-1: concat weights sharing the same LHS along the lane (output) dim
    wx_m = jnp.concatenate([_pad2(c1md['w_l'].T, fmp, hp),   # x_m --(a_dm)--> h_d
                            _pad2(c1dm['w_r'].T, fmp, hp)],  # x_m -- self --> h_m
                           axis=1)
    wx_d = jnp.concatenate([_pad2(c1dm['w_l'].T, fdp, hp),   # x_d --(a_md)--> h_m
                            _pad2(c1md['w_r'].T, fdp, hp)],  # x_d -- self --> h_d
                           axis=1)

    # layer-2 with the decoder lin1 halves folded in (z_d path uses wd1d, z_m wd1m)
    a_md_f = c2md['w_l'].T @ wd1d      # h_m --(a_dm)--> z_d_proj
    b_md_f = c2md['w_r'].T @ wd1d      # h_d -- self --> z_d_proj
    a_dm_f = c2dm['w_l'].T @ wd1m      # h_d --(a_md)--> z_m_proj
    b_dm_f = c2dm['w_r'].T @ wd1m      # h_m -- self --> z_m_proj
    b2_d = c2md['b'] @ wd1d + bd1      # fold the decoder lin1 bias here
    b2_m = c2dm['b'] @ wd1m

    wh_m = jnp.concatenate([_pad2(a_md_f, hp, hp), _pad2(b_dm_f, hp, hp)], axis=1)
    wh_d = jnp.concatenate([_pad2(a_dm_f, hp, hp), _pad2(b_md_f, hp, hp)], axis=1)

    bias_blk = (jnp.zeros((8, hp), jnp.float32)
                .at[0, :h].set(jnp.asarray(c1md['b'], jnp.float32))
                .at[1, :h].set(jnp.asarray(c1dm['b'], jnp.float32))
                .at[2, :h].set(b2_d)
                .at[3, :h].set(b2_m))

    wd2 = _pad2(params['lin2']['w'].T, hp, out_pad)
    bd2 = _pad2(jnp.asarray(params['lin2']['b'], jnp.float32).reshape(1, -1), 8, out_pad)

    blocks = [_pad2(wx_m, fmp, lane_w), _pad2(wx_d, fdp, lane_w),
              _pad2(wh_m, hp, lane_w), _pad2(wh_d, hp, lane_w),
              _pad2(bias_blk, 8, lane_w),
              _pad2(wd2, hp, lane_w), _pad2(bd2, 8, lane_w)]
    w_slab = jnp.concatenate(blocks, axis=0)                  # single (rows, lane_w) slab

    r_wxm = 0
    r_wxd = r_wxm + fmp
    r_whm = r_wxd + fdp
    r_whd = r_whm + hp
    r_b = r_whd + hp
    r_w2 = r_b + 8
    r_b2 = r_w2 + hp
    offs = (r_wxm, r_wxd, r_whm, r_whd, r_b, r_w2, r_b2)

    x_m_p = _pad2(x_m, n_m, fmp)
    x_d_p = _pad2(x_d, n_d, fdp)

    flops = 2 * (n_m * fmp * 2 * hp + n_d * fdp * 2 * hp
                 + 2 * (n_d * n_m * hp + n_m * n_d * hp)
                 + n_m * hp * 2 * hp + n_d * hp * 2 * hp
                 + e_pad * (n_m + n_d) * hp + e_pad * hp * out_pad)
    bytes_accessed = 4 * (a_dm.size + a_md.size + x_m_p.size + x_d_p.size
                          + sel.size + w_slab.size + e_pad * out_pad)

    kernel = _make_kernel(fmp, fdp, hp, out_pad, offs)
    out_full = pl.pallas_call(
        kernel,
        out_shape=jax.ShapeDtypeStruct((e_pad, out_pad), jnp.float32),
        in_specs=[_VMEM_SPEC] * 6,
        out_specs=_VMEM_SPEC,
        cost_estimate=pl.CostEstimate(flops=flops, transcendentals=0,
                                      bytes_accessed=bytes_accessed),
    )(a_dm, a_md, x_m_p, x_d_p, sel, w_slab)
    # TODO(synk): for graphs where the dense (n_dst, n_src) adjacency no longer fits
    # VMEM (v7x: 64 MiB/TC; v5e default scoped 16 MiB), tile a grid over dst-row blocks
    # ("parallel") with a src-block reduction axis ("arbitrary") and raise
    # pltpu.CompilerParams(vmem_limit_bytes=...).
    return out_full[:e, :out_features]


def reference_forward(params, x_dict, edge_index_dict, edge_label_index):
    """Pure-JAX reference with identical semantics (for validation)."""
    x_m, x_d = x_dict['microbes'], x_dict['diseases']
    a_dm = build_norm_adj(edge_index_dict[('microbes', 'to', 'diseases')],
                          x_m.shape[0], x_d.shape[0])
    a_md = build_norm_adj(edge_index_dict[('diseases', 'rev_to', 'microbes')],
                          x_d.shape[0], x_m.shape[0])

    def sage(a, xs, xd, p, relu):
        o = (a @ xs) @ p['w_l'].T + xd @ p['w_r'].T + p['b']
        return jnp.maximum(o, 0.0) if relu else o

    h_d = sage(a_dm, x_m, x_d, params['conv1_md'], True)
    h_m = sage(a_md, x_d, x_m, params['conv1_dm'], True)
    z_d = sage(a_dm, h_m, h_d, params['conv2_md'], False)
    z_m = sage(a_md, h_d, h_m, params['conv2_dm'], False)
    row, col = edge_label_index[0], edge_label_index[1]
    z = jnp.concatenate([z_m[row], z_d[col]], axis=-1)
    hh = jnp.maximum(z @ params['lin1']['w'].T + params['lin1']['b'], 0.0)
    return hh @ params['lin2']['w'].T + params['lin2']['b']


# ----------------------------- param init ----------------------------------

def init_params(key, f_m, f_d, hidden, out_features=1):
    ks = iter(jax.random.split(key, 32))

    def lin(k, out_f, in_f):
        return 0.1 * jax.random.normal(k, (out_f, in_f), jnp.float32)

    def bias(k, out_f):
        return 0.1 * jax.random.normal(k, (out_f,), jnp.float32)

    return {
        'conv1_md': {'w_l': lin(next(ks), hidden, f_m),
                     'w_r': lin(next(ks), hidden, f_d),
                     'b': bias(next(ks), hidden)},
        'conv1_dm': {'w_l': lin(next(ks), hidden, f_d),
                     'w_r': lin(next(ks), hidden, f_m),
                     'b': bias(next(ks), hidden)},
        'conv2_md': {'w_l': lin(next(ks), hidden, hidden),
                     'w_r': lin(next(ks), hidden, hidden),
                     'b': bias(next(ks), hidden)},
        'conv2_dm': {'w_l': lin(next(ks), hidden, hidden),
                     'w_r': lin(next(ks), hidden, hidden),
                     'b': bias(next(ks), hidden)},
        'lin1': {'w': lin(next(ks), hidden, 2 * hidden),
                 'b': bias(next(ks), hidden)},
        'lin2': {'w': lin(next(ks), out_features, hidden),
                 'b': bias(next(ks), out_features)},
    }


# --------------------------------- main -------------------------------------

if __name__ == "__main__":
    key = jax.random.PRNGKey(0)
    k_xm, k_xd, k_e1, k_e2, k_lbl, k_p = jax.random.split(key, 6)

    N_M, N_D = 16, 12          # microbes / diseases node counts
    F_M, F_D = 24, 40          # raw feature dims
    HIDDEN = 32
    N_EDGES, N_LABEL = 20, 8

    x_dict = {
        'microbes': jax.random.normal(k_xm, (N_M, F_M), jnp.float32),
        'diseases': jax.random.normal(k_xd, (N_D, F_D), jnp.float32),
    }
    ei_md = jnp.stack([
        jax.random.randint(k_e1, (N_EDGES,), 0, N_M),
        jax.random.randint(jax.random.fold_in(k_e1, 1), (N_EDGES,), 0, N_D),
    ])
    # reverse edge type (as to_hetero on a bipartite hetero graph would see)
    ei_dm = jnp.stack([ei_md[1], ei_md[0]])
    edge_index_dict = {
        ('microbes', 'to', 'diseases'): ei_md,
        ('diseases', 'rev_to', 'microbes'): ei_dm,
    }
    edge_label_index = jnp.stack([
        jax.random.randint(k_lbl, (N_LABEL,), 0, N_M),
        jax.random.randint(jax.random.fold_in(k_lbl, 1), (N_LABEL,), 0, N_D),
    ])

    params = init_params(k_p, F_M, F_D, HIDDEN, out_features=1)

    model_forward_jit = jax.jit(model_forward)
    out = model_forward_jit(params, x_dict, edge_index_dict, edge_label_index)
    out = jax.block_until_ready(out)

    ref = reference_forward(params, x_dict, edge_index_dict, edge_label_index)
    assert out.shape == (N_LABEL, 1), out.shape
    assert jnp.allclose(out, ref, atol=2e-3, rtol=2e-3), (out, ref)

    print("KERNEL_OK")
</pallas_src>

<mosaic_0001>
module attributes {stable_mosaic.version = 11 : i64} {
  func.func @kernel(%arg0: memref<12x16xf32, #tpu.memory_space<vmem>>, %arg1: memref<16x12xf32, #tpu.memory_space<vmem>>, %arg2: memref<16x24xf32, #tpu.memory_space<vmem>>, %arg3: memref<12x40xf32, #tpu.memory_space<vmem>>, %arg4: memref<8x28xf32, #tpu.memory_space<vmem>>, %arg5: memref<176x128xf32, #tpu.memory_space<vmem>>, %arg6: memref<8x128xf32, #tpu.memory_space<vmem>>) attributes {dimension_semantics = [], scalar_prefetch = 0 : i64, scratch_operands = 0 : i64, tpu.core_type = #tpu.core_type<tc>} {
    %c0 = arith.constant 0 : index
    %c0_0 = arith.constant 0 : index
    %0 = vector.load %arg2[%c0, %c0_0] : memref<16x24xf32, #tpu.memory_space<vmem>>, vector<16x24xf32>
    %c0_1 = arith.constant 0 : index
    %c0_2 = arith.constant 0 : index
    %1 = vector.load %arg3[%c0_1, %c0_2] : memref<12x40xf32, #tpu.memory_space<vmem>>, vector<12x40xf32>
    %c0_3 = arith.constant 0 : index
    %c0_4 = arith.constant 0 : index
    %2 = vector.load %arg0[%c0_3, %c0_4] : memref<12x16xf32, #tpu.memory_space<vmem>>, vector<12x16xf32>
    %c0_5 = arith.constant 0 : index
    %c0_6 = arith.constant 0 : index
    %3 = vector.load %arg1[%c0_5, %c0_6] : memref<16x12xf32, #tpu.memory_space<vmem>>, vector<16x12xf32>
    %c128 = arith.constant 128 : index
    %c0_7 = arith.constant 0 : index
    %4 = vector.load %arg5[%c128, %c0_7] : memref<176x128xf32, #tpu.memory_space<vmem>>, vector<8x32xf32>
    %5 = vector.extract_strided_slice %4 {offsets = [0, 0], sizes = [1, 32], strides = [1, 1]} : vector<8x32xf32> to vector<1x32xf32>
    %6 = vector.extract_strided_slice %4 {offsets = [1, 0], sizes = [1, 32], strides = [1, 1]} : vector<8x32xf32> to vector<1x32xf32>
    %7 = vector.extract_strided_slice %4 {offsets = [2, 0], sizes = [1, 32], strides = [1, 1]} : vector<8x32xf32> to vector<1x32xf32>
    %8 = vector.extract_strided_slice %4 {offsets = [3, 0], sizes = [1, 32], strides = [1, 1]} : vector<8x32xf32> to vector<1x32xf32>
    %c0_8 = arith.constant 0 : index
    %c0_9 = arith.constant 0 : index
    %9 = vector.load %arg5[%c0_8, %c0_9] : memref<176x128xf32, #tpu.memory_space<vmem>>, vector<24x64xf32>
    %cst = arith.constant dense<0.000000e+00> : vector<16x64xf32>
    %10 = tpu.matmul %0, %9, %cst {dimension_numbers = #tpu.dot_dimension_numbers<[1], [0], [0], [1], [0, 0, 1, 1], [], []>} : vector<16x24xf32>, vector<24x64xf32>, vector<16x64xf32> -> vector<16x64xf32>
    %c24 = arith.constant 24 : index
    %c0_10 = arith.constant 0 : index
    %11 = vector.load %arg5[%c24, %c0_10] : memref<176x128xf32, #tpu.memory_space<vmem>>, vector<40x64xf32>
    %cst_11 = arith.constant dense<0.000000e+00> : vector<12x64xf32>
    %12 = tpu.matmul %1, %11, %cst_11 {dimension_numbers = #tpu.dot_dimension_numbers<[1], [0], [0], [1], [0, 0, 1, 1], [], []>} : vector<12x40xf32>, vector<40x64xf32>, vector<12x64xf32> -> vector<12x64xf32>
    %13 = vector.extract_strided_slice %10 {offsets = [0, 0], sizes = [16, 32], strides = [1, 1]} : vector<16x64xf32> to vector<16x32xf32>
    %cst_12 = arith.constant dense<0.000000e+00> : vector<12x32xf32>
    %14 = tpu.matmul %2, %13, %cst_12 {dimension_numbers = #tpu.dot_dimension_numbers<[1], [0], [0], [1], [0, 0, 1, 1], [], []>} : vector<12x16xf32>, vector<16x32xf32>, vector<12x32xf32> -> vector<12x32xf32>
    %15 = vector.extract_strided_slice %12 {offsets = [0, 32], sizes = [12, 32], strides = [1, 1]} : vector<12x64xf32> to vector<12x32xf32>
    %16 = arith.addf %14, %15 : vector<12x32xf32>
    %17 = vector.broadcast %5 : vector<1x32xf32> to vector<12x32xf32>
    %18 = arith.addf %16, %17 : vector<12x32xf32>
    %cst_13 = arith.constant 0.000000e+00 : f32
    %19 = vector.broadcast %cst_13 : f32 to vector<12x32xf32>
    %20 = arith.maximumf %18, %19 : vector<12x32xf32>
    %21 = vector.extract_strided_slice %12 {offsets = [0, 0], sizes = [12, 32], strides = [1, 1]} : vector<12x64xf32> to vector<12x32xf32>
    %cst_14 = arith.constant dense<0.000000e+00> : vector<16x32xf32>
    %22 = tpu.matmul %3, %21, %cst_14 {dimension_numbers = #tpu.dot_dimension_numbers<[1], [0], [0], [1], [0, 0, 1, 1], [], []>} : vector<16x12xf32>, vector<12x32xf32>, vector<16x32xf32> -> vector<16x32xf32>
    %23 = vector.extract_strided_slice %10 {offsets = [0, 32], sizes = [16, 32], strides = [1, 1]} : vector<16x64xf32> to vector<16x32xf32>
    %24 = arith.addf %22, %23 : vector<16x32xf32>
    %25 = vector.broadcast %6 : vector<1x32xf32> to vector<16x32xf32>
    %26 = arith.addf %24, %25 : vector<16x32xf32>
    %cst_15 = arith.constant 0.000000e+00 : f32
    %27 = vector.broadcast %cst_15 : f32 to vector<16x32xf32>
    %28 = arith.maximumf %26, %27 : vector<16x32xf32>
    %c64 = arith.constant 64 : index
    %c0_16 = arith.constant 0 : index
    %29 = vector.load %arg5[%c64, %c0_16] : memref<176x128xf32, #tpu.memory_space<vmem>>, vector<32x64xf32>
    %cst_17 = arith.constant dense<0.000000e+00> : vector<16x64xf32>
    %30 = tpu.matmul %28, %29, %cst_17 {dimension_numbers = #tpu.dot_dimension_numbers<[1], [0], [0], [1], [0, 0, 1, 1], [], []>} : vector<16x32xf32>, vector<32x64xf32>, vector<16x64xf32> -> vector<16x64xf32>
    %c96 = arith.constant 96 : index
    %c0_18 = arith.constant 0 : index
    %31 = vector.load %arg5[%c96, %c0_18] : memref<176x128xf32, #tpu.memory_space<vmem>>, vector<32x64xf32>
    %cst_19 = arith.constant dense<0.000000e+00> : vector<12x64xf32>
    %32 = tpu.matmul %20, %31, %cst_19 {dimension_numbers = #tpu.dot_dimension_numbers<[1], [0], [0], [1], [0, 0, 1, 1], [], []>} : vector<12x32xf32>, vector<32x64xf32>, vector<12x64xf32> -> vector<12x64xf32>
    %33 = vector.extract_strided_slice %30 {offsets = [0, 0], sizes = [16, 32], strides = [1, 1]} : vector<16x64xf32> to vector<16x32xf32>
    %cst_20 = arith.constant dense<0.000000e+00> : vector<12x32xf32>
    %34 = tpu.matmul %2, %33, %cst_20 {dimension_numbers = #tpu.dot_dimension_numbers<[1], [0], [0], [1], [0, 0, 1, 1], [], []>} : vector<12x16xf32>, vector<16x32xf32>, vector<12x32xf32> -> vector<12x32xf32>
    %35 = vector.extract_strided_slice %32 {offsets = [0, 32], sizes = [12, 32], strides = [1, 1]} : vector<12x64xf32> to vector<12x32xf32>
    %36 = arith.addf %34, %35 : vector<12x32xf32>
    %37 = vector.broadcast %7 : vector<1x32xf32> to vector<12x32xf32>
    %38 = arith.addf %36, %37 : vector<12x32xf32>
    %39 = vector.extract_strided_slice %32 {offsets = [0, 0], sizes = [12, 32], strides = [1, 1]} : vector<12x64xf32> to vector<12x32xf32>
    %cst_21 = arith.constant dense<0.000000e+00> : vector<16x32xf32>
    %40 = tpu.matmul %3, %39, %cst_21 {dimension_numbers = #tpu.dot_dimension_numbers<[1], [0], [0], [1], [0, 0, 1, 1], [], []>} : vector<16x12xf32>, vector<12x32xf32>, vector<16x32xf32> -> vector<16x32xf32>
    %41 = vector.extract_strided_slice %30 {offsets = [0, 32], sizes = [16, 32], strides = [1, 1]} : vector<16x64xf32> to vector<16x32xf32>
    %42 = arith.addf %40, %41 : vector<16x32xf32>
    %43 = vector.broadcast %8 : vector<1x32xf32> to vector<16x32xf32>
    %44 = arith.addf %42, %43 : vector<16x32xf32>
    %45 = tpu.concatenate %44, %38 in 0 : vector<16x32xf32>, vector<12x32xf32> -> vector<28x32xf32>
    %c0_22 = arith.constant 0 : index
    %c0_23 = arith.constant 0 : index
    %46 = vector.load %arg4[%c0_22, %c0_23] : memref<8x28xf32, #tpu.memory_space<vmem>>, vector<8x28xf32>
    %cst_24 = arith.constant dense<0.000000e+00> : vector<8x32xf32>
    %47 = tpu.matmul %46, %45, %cst_24 {dimension_numbers = #tpu.dot_dimension_numbers<[1], [0], [0], [1], [0, 0, 1, 1], [], []>} : vector<8x28xf32>, vector<28x32xf32>, vector<8x32xf32> -> vector<8x32xf32>
    %cst_25 = arith.constant 0.000000e+00 : f32
    %48 = vector.broadcast %cst_25 : f32 to vector<8x32xf32>
    %49 = arith.maximumf %47, %48 : vector<8x32xf32>
    %c136 = arith.constant 136 : index
    %c0_26 = arith.constant 0 : index
    %50 = vector.load %arg5[%c136, %c0_26] : memref<176x128xf32, #tpu.memory_space<vmem>>, vector<32x128xf32>
    %c168 = arith.constant 168 : index
    %c0_27 = arith.constant 0 : index
    %51 = vector.load %arg5[%c168, %c0_27] : memref<176x128xf32, #tpu.memory_space<vmem>>, vector<1x128xf32>
    %cst_28 = arith.constant dense<0.000000e+00> : vector<8x128xf32>
    %52 = tpu.matmul %49, %50, %cst_28 {dimension_numbers = #tpu.dot_dimension_numbers<[1], [0], [0], [1], [0, 0, 1, 1], [], []>} : vector<8x32xf32>, vector<32x128xf32>, vector<8x128xf32> -> vector<8x128xf32>
    %53 = vector.broadcast %51 : vector<1x128xf32> to vector<8x128xf32>
    %54 = arith.addf %52, %53 : vector<8x128xf32>
    %c0_29 = arith.constant 0 : index
    %c0_30 = arith.constant 0 : index
    %55 = vector.load %arg6[%c0_29, %c0_30] : memref<8x128xf32, #tpu.memory_space<vmem>>, vector<8x128xf32>
    tpu.vector_store %arg6[%c0_29, %c0_30], %54 {strides = array<i32>} : memref<8x128xf32, #tpu.memory_space<vmem>>, vector<8x128xf32>,
    return
  }
}

</mosaic_0001>

<llo_original>
// kernel: model_forward.1
$region0: #{model_forward.1}
  #allocation0 [shape = 'u32[]', space=smem, size = 0x4, offset = 0x4, fixed_abs, tag = 'smem constant byte address 0x4 - core index']
  #allocation1 [shape = 'u32[144,128]{1,0:T(1,128)}', space=vmem, size = 0x12000, scoped, tag = 'internal scratch']
  %s0 = inlined_call_operand.vmem [shape: f32[12,16], index: 0, kind: input, shape index: {}]
  %s1 = inlined_call_operand.vmem [shape: f32[16,12], index: 1, kind: input, shape index: {}]
  %s2 = inlined_call_operand.vmem [shape: f32[16,24], index: 2, kind: input, shape index: {}]
  %s3 = inlined_call_operand.vmem [shape: f32[12,40], index: 3, kind: input, shape index: {}]
  %s4 = inlined_call_operand.vmem [shape: f32[8,28], index: 4, kind: input, shape index: {}]
  %s5 = inlined_call_operand.vmem [shape: f32[176,128], index: 5, kind: input, shape index: {}]
  %s6 = inlined_call_operand.vmem [shape: f32[8,128], index: 6, kind: output, shape index: {}]
  %s7 = sld [smem:[#allocation0]]
  $region34: #{model_forward.1} parent=0
    _
  %s9 = ssub.s32 1, %s7
  %s10 = scalar_select 0, %s9, %s7
  // Predicated region
  $region2: #{model_forward.1} parent=0 // pred_check
    _
  $region3: #{model_forward.1} parent=0 // pred_check_branch
    %12 = sbr.rel (0) target = $region5
  $region4: #{model_forward.1} parent=0 // pred_region
    _
  $region5: #{model_forward.1} parent=0 // pred_fallthru
    _
  // Predicated region
  $region6: #{model_forward.1} parent=0 // pred_check
    _
  $region7: #{model_forward.1} parent=0 // pred_check_branch
    %14 = sbr.rel (0) target = $region9
  $region8: #{model_forward.1} parent=0 // pred_region
    _
  $region9: #{model_forward.1} parent=0 // pred_fallthru
    _
  // Predicated region
  $region10: #{model_forward.1} parent=0 // pred_check
    _
  $region11: #{model_forward.1} parent=0 // pred_check_branch
    %16 = sbr.rel (0) target = $region13
  $region12: #{model_forward.1} parent=0 // pred_region
    _
  $region13: #{model_forward.1} parent=0 // pred_fallthru
    _
  // Predicated region
  $region14: #{model_forward.1} parent=0 // pred_check
    _
  $region15: #{model_forward.1} parent=0 // pred_check_branch
    %18 = sbr.rel (0) target = $region17
  $region16: #{model_forward.1} parent=0 // pred_region
    _
  $region17: #{model_forward.1} parent=0 // pred_fallthru
    _
  // Predicated region
  $region18: #{model_forward.1} parent=0 // pred_check
    _
  $region19: #{model_forward.1} parent=0 // pred_check_branch
    %20 = sbr.rel (0) target = $region21
  $region20: #{model_forward.1} parent=0 // pred_region
    _
  $region21: #{model_forward.1} parent=0 // pred_fallthru
    _
  // Predicated region
  $region22: #{model_forward.1} parent=0 // pred_check
    _
  $region23: #{model_forward.1} parent=0 // pred_check_branch
    %22 = sbr.rel (0) target = $region25
  $region24: #{model_forward.1} parent=0 // pred_region
    _
  $region25: #{model_forward.1} parent=0 // pred_fallthru
    _
  %v23 = vld [vmem:[%s2] sm:$0xff]
  %v24 = vld [vmem:[%s2 + $0x8] sm:$0xff]
  %v25 = vld [vmem:[%s3] sm:$0xff]
  %v26 = vld [vmem:[%s3 + $0x8] sm:$0xf]
  %v27 = vld [vmem:[%s0] sm:$0xff]
  %v28 = vld [vmem:[%s0 + $0x8] sm:$0xf]
  %v29 = vld [vmem:[%s1] sm:$0xff]
  %v30 = vld [vmem:[%s1 + $0x8] sm:$0xff]
  %v31 = vld [vmem:[%s5 + $0x80] sm:$0xff]
  %v32 = vld [vmem:[%s5] sm:$0xff]
  %v33 = vld [vmem:[%s5 + $0x8] sm:$0xff]
  %v34 = vld [vmem:[%s5 + $0x10] sm:$0xff]
  %vm35 = vcmask 195584
  %v37 = vsel %vm35, %v23, 0
  %v40 = vsel %vm35, %v24, 0
  %42 = vmatprep.subr.mxu0 0.0
  %43 = vmatpush1.msra.mxu0 %v32
  %44 = vmatprep.subr.mxu0 0.0
  %45 = vmatpush1.msra.mxu0 %v33
  %46 = vmatprep.subr.mxu0 0.0
  %47 = vmatpush1.msra.mxu0 %v34
  %48 = vmatprep.subr.mxu0 0.0
  %49 = vmatpush1.msra.mxu0 0.0
  %50 = vmatprep.subr.mxu0 0.0
  %51 = vmatpush1.msra.mxu0 0.0
  %52 = vmatprep.subr.mxu0 0.0
  %53 = vmatpush1.msra.mxu0 0.0
  %54 = vmatprep.subr.mxu0 0.0
  %55 = vmatpush1.msra.mxu0 0.0
  %56 = vmatprep.subr.mxu0 0.0
  %57 = vmatpush1.msra.mxu0 0.0
  %58 = vmatprep.subr.mxu0 0.0
  %59 = vmatpush1.msra.mxu0 0.0
  %60 = vmatprep.subr.mxu0 0.0
  %61 = vmatpush1.msra.mxu0 0.0
  %62 = vmatprep.subr.mxu0 0.0
  %63 = vmatpush1.msra.mxu0 0.0
  %64 = vmatprep.subr.mxu0 0.0
  %65 = vmatpush1.msra.mxu0 0.0
  %66 = vmatprep.subr.mxu0 0.0
  %67 = vmatpush1.msra.mxu0 0.0
  %68 = vmatprep.subr.mxu0 0.0
  %69 = vmatpush1.msra.mxu0 0.0
  %70 = vmatprep.subr.mxu0 0.0
  %71 = vmatpush1.msra.mxu0 0.0
  %72 = vmatprep.subr.mxu0 0.0
  %73 = vmatpush1.msra.mxu0 0.0
  %74 = vmatprep.subr.mxu0 0.0
  %75 = vmatpush1.msra.mxu0 0.0
  %76 = vmatprep.subr.mxu0 0.0
  %77 = vmatpush1.msra.mxu0 0.0
  %78 = vmatprep.subr.mxu0 0.0
  %79 = vmatpush1.msra.mxu0 0.0
  %80 = vmatprep.subr.mxu0 0.0
  %81 = vmatpush1.msra.mxu0 0.0
  %82 = vmatprep.subr.mxu0 0.0
  %83 = vmatpush1.msra.mxu0 0.0
  %84 = vmatprep.subr.mxu0 0.0
  %85 = vmatpush1.msra.mxu0 0.0
  %86 = vmatprep.subr.mxu0 0.0
  %87 = vmatpush1.msra.mxu0 0.0
  %88 = vmatprep.subr.mxu0 0.0
  %89 = vmatpush1.msra.mxu0 0.0
  %90 = vmatprep.subr.mxu0 0.0
  %91 = vmatpush1.msra.mxu0 0.0
  %92 = vmatprep.subr.mxu0 0.0
  %93 = vmatpush1.msra.mxu0 0.0
  %94 = vmatprep.subr.mxu0 0.0
  %95 = vmatpush1.msra.mxu0 0.0
  %96 = vmatprep.subr.mxu0 0.0
  %97 = vmatpush1.msra.mxu0 0.0
  %98 = vmatprep.subr.mxu0 0.0
  %99 = vmatpush1.msra.mxu0 0.0
  %100 = vmatprep.subr.mxu0 0.0
  %101 = vmatpush1.msra.mxu0 0.0
  %102 = vmatprep.subr.mxu0 0.0
  %103 = vmatpush1.msra.mxu0 0.0
  %104 = vmatprep.subr.mxu0 0.0
  %105 = vmatpush1.msra.mxu0 0.0
  %106 = vmatprep.mubr.f32.mxu0 0.0
  %107 = vmatmul.mubr.f32.gmra.mrb[0].mxu0 %v37
  %v108 = vpop.f32.mrb[0].mxu0
  %v109 = vadd.f32 0.0, %v108
  %v110 = vpop.f32.mrb[0].mxu0
  %111 = vmatprep.mubr.f32.mxu0 0.0
  %112 = vmatmul.mubr.f32.gmra.mrb[0].mxu0 %v40
  %v113 = vpop.f32.mrb[0].mxu0
  %v114 = vadd.f32 0.0, %v113
  %v115 = vpop.f32.mrb[0].mxu0
  %116 = vdwg.mxu0
  %v117 = vld [vmem:[%s5 + $0x18] sm:$0xff]
  %v118 = vld [vmem:[%s5 + $0x20] sm:$0xff]
  %v119 = vld [vmem:[%s5 + $0x28] sm:$0xff]
  %v120 = vld [vmem:[%s5 + $0x30] sm:$0xff]
  %v121 = vld [vmem:[%s5 + $0x38] sm:$0xff]
  %vm122 = vcmask 326656
  %v124 = vsel %vm122, %v25, 0
  %v127 = vsel %vm122, %v26, 0
  %129 = vmatprep.subr.mxu0 0.0
  %130 = vmatpush1.msra.mxu0 %v117
  %131 = vmatprep.subr.mxu0 0.0
  %132 = vmatpush1.msra.mxu0 %v118
  %133 = vmatprep.subr.mxu0 0.0
  %134 = vmatpush1.msra.mxu0 %v119
  %135 = vmatprep.subr.mxu0 0.0
  %136 = vmatpush1.msra.mxu0 %v120
  %137 = vmatprep.subr.mxu0 0.0
  %138 = vmatpush1.msra.mxu0 %v121
  %139 = vmatprep.subr.mxu0 0.0
  %140 = vmatpush1.msra.mxu0 0.0
  %141 = vmatprep.subr.mxu0 0.0
  %142 = vmatpush1.msra.mxu0 0.0
  %143 = vmatprep.subr.mxu0 0.0
  %144 = vmatpush1.msra.mxu0 0.0
  %145 = vmatprep.subr.mxu0 0.0
  %146 = vmatpush1.msra.mxu0 0.0
  %147 = vmatprep.subr.mxu0 0.0
  %148 = vmatpush1.msra.mxu0 0.0
  %149 = vmatprep.subr.mxu0 0.0
  %150 = vmatpush1.msra.mxu0 0.0
  %151 = vmatprep.subr.mxu0 0.0
  %152 = vmatpush1.msra.mxu0 0.0
  %153 = vmatprep.subr.mxu0 0.0
  %154 = vmatpush1.msra.mxu0 0.0
  %155 = vmatprep.subr.mxu0 0.0
  %156 = vmatpush1.msra.mxu0 0.0
  %157 = vmatprep.subr.mxu0 0.0
  %158 = vmatpush1.msra.mxu0 0.0
  %159 = vmatprep.subr.mxu0 0.0
  %160 = vmatpush1.msra.mxu0 0.0
  %161 = vmatprep.subr.mxu0 0.0
  %162 = vmatpush1.msra.mxu0 0.0
  %163 = vmatprep.subr.mxu0 0.0
  %164 = vmatpush1.msra.mxu0 0.0
  %165 = vmatprep.subr.mxu0 0.0
  %166 = vmatpush1.msra.mxu0 0.0
  %167 = vmatprep.subr.mxu0 0.0
  %168 = vmatpush1.msra.mxu0 0.0
  %169 = vmatprep.subr.mxu0 0.0
  %170 = vmatpush1.msra.mxu0 0.0
  %171 = vmatprep.subr.mxu0 0.0
  %172 = vmatpush1.msra.mxu0 0.0
  %173 = vmatprep.subr.mxu0 0.0
  %174 = vmatpush1.msra.mxu0 0.0
  %175 = vmatprep.subr.mxu0 0.0
  %176 = vmatpush1.msra.mxu0 0.0
  %177 = vmatprep.subr.mxu0 0.0
  %178 = vmatpush1.msra.mxu0 0.0
  %179 = vmatprep.subr.mxu0 0.0
  %180 = vmatpush1.msra.mxu0 0.0
  %181 = vmatprep.subr.mxu0 0.0
  %182 = vmatpush1.msra.mxu0 0.0
  %183 = vmatprep.subr.mxu0 0.0
  %184 = vmatpush1.msra.mxu0 0.0
  %185 = vmatprep.subr.mxu0 0.0
  %186 = vmatpush1.msra.mxu0 0.0
  %187 = vmatprep.subr.mxu0 0.0
  %188 = vmatpush1.msra.mxu0 0.0
  %189 = vmatprep.subr.mxu0 0.0
  %190 = vmatpush1.msra.mxu0 0.0
  %191 = vmatprep.subr.mxu0 0.0
  %192 = vmatpush1.msra.mxu0 0.0
  %193 = vmatprep.mubr.f32.mxu0 0.0
  %194 = vmatmul.mubr.f32.gmra.mrb[0].mxu0 %v124
  %v195 = vpop.f32.mrb[0].mxu0
  %v196 = vadd.f32 0.0, %v195
  %v197 = vpop.f32.mrb[0].mxu0
  %198 = vmatprep.mubr.f32.mxu0 0.0
  %199 = vmatmul.mubr.f32.gmra.mrb[0].mxu0 %v127
  %v200 = vpop.f32.mrb[0].mxu0
  %v201 = vadd.f32 0.0, %v200
  %v202 = vpop.f32.mrb[0].mxu0
  %203 = vdwg.mxu0
  %206 = vrot.lane.b32.xlu0 %v196, 96
  %v207 = vpop.permute.xlu0 %206
  %208 = vrot.lane.b32.xlu0 %v201, 96
  %v209 = vpop.permute.xlu0 %208
  %vm212 = vcmask 130048
  %v214 = vsel %vm212, %v27, 0
  %v217 = vsel %vm212, %v28, 0
  %219 = vmatprep.subr.mxu0 0.0
  %220 = vmatpush1.msra.mxu0 %v109
  %221 = vmatprep.subr.mxu0 0.0
  %222 = vmatpush1.msra.mxu0 %v114
  %223 = vmatprep.subr.mxu0 0.0
  %224 = vmatpush1.msra.mxu0 0.0
  %225 = vmatprep.subr.mxu0 0.0
  %226 = vmatpush1.msra.mxu0 0.0
  %227 = vmatprep.subr.mxu0 0.0
  %228 = vmatpush1.msra.mxu0 0.0
  %229 = vmatprep.subr.mxu0 0.0
  %230 = vmatpush1.msra.mxu0 0.0
  %231 = vmatprep.subr.mxu0 0.0
  %232 = vmatpush1.msra.mxu0 0.0
  %233 = vmatprep.subr.mxu0 0.0
  %234 = vmatpush1.msra.mxu0 0.0
  %235 = vmatprep.subr.mxu0 0.0
  %236 = vmatpush1.msra.mxu0 0.0
  %237 = vmatprep.subr.mxu0 0.0
  %238 = vmatpush1.msra.mxu0 0.0
  %239 = vmatprep.subr.mxu0 0.0
  %240 = vmatpush1.msra.mxu0 0.0
  %241 = vmatprep.subr.mxu0 0.0
  %242 = vmatpush1.msra.mxu0 0.0
  %243 = vmatprep.subr.mxu0 0.0
  %244 = vmatpush1.msra.mxu0 0.0
  %245 = vmatprep.subr.mxu0 0.0
  %246 = vmatpush1.msra.mxu0 0.0
  %247 = vmatprep.subr.mxu0 0.0
  %248 = vmatpush1.msra.mxu0 0.0
  %249 = vmatprep.subr.mxu0 0.0
  %250 = vmatpush1.msra.mxu0 0.0
  %251 = vmatprep.subr.mxu0 0.0
  %252 = vmatpush1.msra.mxu0 0.0
  %253 = vmatprep.subr.mxu0 0.0
  %254 = vmatpush1.msra.mxu0 0.0
  %255 = vmatprep.subr.mxu0 0.0
  %256 = vmatpush1.msra.mxu0 0.0
  %257 = vmatprep.subr.mxu0 0.0
  %258 = vmatpush1.msra.mxu0 0.0
  %259 = vmatprep.subr.mxu0 0.0
  %260 = vmatpush1.msra.mxu0 0.0
  %261 = vmatprep.subr.mxu0 0.0
  %262 = vmatpush1.msra.mxu0 0.0
  %263 = vmatprep.subr.mxu0 0.0
  %264 = vmatpush1.msra.mxu0 0.0
  %265 = vmatprep.subr.mxu0 0.0
  %266 = vmatpush1.msra.mxu0 0.0
  %267 = vmatprep.subr.mxu0 0.0
  %268 = vmatpush1.msra.mxu0 0.0
  %269 = vmatprep.subr.mxu0 0.0
  %270 = vmatpush1.msra.mxu0 0.0
  %271 = vmatprep.subr.mxu0 0.0
  %272 = vmatpush1.msra.mxu0 0.0
  %273 = vmatprep.subr.mxu0 0.0
  %274 = vmatpush1.msra.mxu0 0.0
  %275 = vmatprep.subr.mxu0 0.0
  %276 = vmatpush1.msra.mxu0 0.0
  %277 = vmatprep.subr.mxu0 0.0
  %278 = vmatpush1.msra.mxu0 0.0
  %279 = vmatprep.subr.mxu0 0.0
  %280 = vmatpush1.msra.mxu0 0.0
  %281 = vmatprep.subr.mxu0 0.0
  %282 = vmatpush1.msra.mxu0 0.0
  %283 = vmatprep.mubr.f32.mxu0 0.0
  %284 = vmatmul.mubr.f32.gmra.mrb[0].mxu0 %v214
  %v285 = vpop.f32.mrb[0].mxu0
  %v286 = vadd.f32 %v207, %v285
  %v287 = vpop.f32.mrb[0].mxu0
  %288 = vmatprep.mubr.f32.mxu0 0.0
  %289 = vmatmul.mubr.f32.gmra.mrb[0].mxu0 %v217
  %v290 = vpop.f32.mrb[0].mxu0
  %v291 = vadd.f32 %v209, %v290
  %v292 = vpop.f32.mrb[0].mxu0
  %293 = vdwg.mxu0
  %v294 = vlaneseq
  %v295 = vshrl.u32 %v294, 7
  %v296 = vsub.s32 0, %v295
  %v297 = vrot.slane %v31, %v296
  %v298 = vadd.f32 %v286, %v297
  %v299 = vadd.f32 %v291, %v297
  %v300 = vmax.f32 %v298, 0.0
  %v301 = vmax.f32 %v299, 0.0
  %304 = vrot.lane.b32.xlu0 %v109, 96
  %v305 = vpop.permute.xlu0 %304
  %306 = vrot.lane.b32.xlu0 %v114, 96
  %v307 = vpop.permute.xlu0 %306
  %vm310 = vcmask 97280
  %v312 = vsel %vm310, %v29, 0
  %v315 = vsel %vm310, %v30, 0
  %vm317 = vcmask 1043456
  %v318 = vsel %vm317, %v201, 0
  %320 = vmatprep.subr.mxu0 0.0
  %321 = vmatpush1.msra.mxu0 %v196
  %322 = vmatprep.subr.mxu0 0.0
  %323 = vmatpush1.msra.mxu0 %v318
  %324 = vmatprep.subr.mxu0 0.0
  %325 = vmatpush1.msra.mxu0 0.0
  %326 = vmatprep.subr.mxu0 0.0
  %327 = vmatpush1.msra.mxu0 0.0
  %328 = vmatprep.subr.mxu0 0.0
  %329 = vmatpush1.msra.mxu0 0.0
  %330 = vmatprep.subr.mxu0 0.0
  %331 = vmatpush1.msra.mxu0 0.0
  %332 = vmatprep.subr.mxu0 0.0
  %333 = vmatpush1.msra.mxu0 0.0
  %334 = vmatprep.subr.mxu0 0.0
  %335 = vmatpush1.msra.mxu0 0.0
  %336 = vmatprep.subr.mxu0 0.0
  %337 = vmatpush1.msra.mxu0 0.0
  %338 = vmatprep.subr.mxu0 0.0
  %339 = vmatpush1.msra.mxu0 0.0
  %340 = vmatprep.subr.mxu0 0.0
  %341 = vmatpush1.msra.mxu0 0.0
  %342 = vmatprep.subr.mxu0 0.0
  %343 = vmatpush1.msra.mxu0 0.0
  %344 = vmatprep.subr.mxu0 0.0
  %345 = vmatpush1.msra.mxu0 0.0
  %346 = vmatprep.subr.mxu0 0.0
  %347 = vmatpush1.msra.mxu0 0.0
  %348 = vmatprep.subr.mxu0 0.0
  %349 = vmatpush1.msra.mxu0 0.0
  %350 = vmatprep.subr.mxu0 0.0
  %351 = vmatpush1.msra.mxu0 0.0
  %352 = vmatprep.subr.mxu0 0.0
  %353 = vmatpush1.msra.mxu0 0.0
  %354 = vmatprep.subr.mxu0 0.0
  %355 = vmatpush1.msra.mxu0 0.0
  %356 = vmatprep.subr.mxu0 0.0
  %357 = vmatpush1.msra.mxu0 0.0
  %358 = vmatprep.subr.mxu0 0.0
  %359 = vmatpush1.msra.mxu0 0.0
  %360 = vmatprep.subr.mxu0 0.0
  %361 = vmatpush1.msra.mxu0 0.0
  %362 = vmatprep.subr.mxu0 0.0
  %363 = vmatpush1.msra.mxu0 0.0
  %364 = vmatprep.subr.mxu0 0.0
  %365 = vmatpush1.msra.mxu0 0.0
  %366 = vmatprep.subr.mxu0 0.0
  %367 = vmatpush1.msra.mxu0 0.0
  %368 = vmatprep.subr.mxu0 0.0
  %369 = vmatpush1.msra.mxu0 0.0
  %370 = vmatprep.subr.mxu0 0.0
  %371 = vmatpush1.msra.mxu0 0.0
  %372 = vmatprep.subr.mxu0 0.0
  %373 = vmatpush1.msra.mxu0 0.0
  %374 = vmatprep.subr.mxu0 0.0
  %375 = vmatpush1.msra.mxu0 0.0
  %376 = vmatprep.subr.mxu0 0.0
  %377 = vmatpush1.msra.mxu0 0.0
  %378 = vmatprep.subr.mxu0 0.0
  %379 = vmatpush1.msra.mxu0 0.0
  %380 = vmatprep.subr.mxu0 0.0
  %381 = vmatpush1.msra.mxu0 0.0
  %382 = vmatprep.subr.mxu0 0.0
  %383 = vmatpush1.msra.mxu0 0.0
  %384 = vmatprep.mubr.f32.mxu0 0.0
  %385 = vmatmul.mubr.f32.gmra.mrb[0].mxu0 %v312
  %v386 = vpop.f32.mrb[0].mxu0
  %v387 = vadd.f32 %v305, %v386
  %v388 = vpop.f32.mrb[0].mxu0
  %389 = vmatprep.mubr.f32.mxu0 0.0
  %390 = vmatmul.mubr.f32.gmra.mrb[0].mxu0 %v315
  %v391 = vpop.f32.mrb[0].mxu0
  %v392 = vadd.f32 %v307, %v391
  %v393 = vpop.f32.mrb[0].mxu0
  %394 = vdwg.mxu0
  %v395 = vlaneseq
  %v396 = vshrl.u32 %v395, 7
  %v397 = vsub.s32 1, %v396
  %v398 = vrot.slane %v31, %v397
  %v399 = vadd.f32 %v387, %v398
  %v400 = vadd.f32 %v392, %v398
  %v401 = vmax.f32 %v399, 0.0
  %v402 = vmax.f32 %v400, 0.0
  %v403 = vld [vmem:[%s5 + $0x40] sm:$0xff]
  %v404 = vld [vmem:[%s5 + $0x48] sm:$0xff]
  %v405 = vld [vmem:[%s5 + $0x50] sm:$0xff]
  %v406 = vld [vmem:[%s5 + $0x58] sm:$0xff]
  %vm407 = vcmask 261120
  %v409 = vsel %vm407, %v401, 0
  %v412 = vsel %vm407, %v402, 0
  %414 = vmatprep.subr.mxu0 0.0
  %415 = vmatpush1.msra.mxu0 %v403
  %416 = vmatprep.subr.mxu0 0.0
  %417 = vmatpush1.msra.mxu0 %v404
  %418 = vmatprep.subr.mxu0 0.0
  %419 = vmatpush1.msra.mxu0 %v405
  %420 = vmatprep.subr.mxu0 0.0
  %421 = vmatpush1.msra.mxu0 %v406
  %422 = vmatprep.subr.mxu0 0.0
  %423 = vmatpush1.msra.mxu0 0.0
  %424 = vmatprep.subr.mxu0 0.0
  %425 = vmatpush1.msra.mxu0 0.0
  %426 = vmatprep.subr.mxu0 0.0
  %427 = vmatpush1.msra.mxu0 0.0
  %428 = vmatprep.subr.mxu0 0.0
  %429 = vmatpush1.msra.mxu0 0.0
  %430 = vmatprep.subr.mxu0 0.0
  %431 = vmatpush1.msra.mxu0 0.0
  %432 = vmatprep.subr.mxu0 0.0
  %433 = vmatpush1.msra.mxu0 0.0
  %434 = vmatprep.subr.mxu0 0.0
  %435 = vmatpush1.msra.mxu0 0.0
  %436 = vmatprep.subr.mxu0 0.0
  %437 = vmatpush1.msra.mxu0 0.0
  %438 = vmatprep.subr.mxu0 0.0
  %439 = vmatpush1.msra.mxu0 0.0
  %440 = vmatprep.subr.mxu0 0.0
  %441 = vmatpush1.msra.mxu0 0.0
  %442 = vmatprep.subr.mxu0 0.0
  %443 = vmatpush1.msra.mxu0 0.0
  %444 = vmatprep.subr.mxu0 0.0
  %445 = vmatpush1.msra.mxu0 0.0
  %446 = vmatprep.subr.mxu0 0.0
  %447 = vmatpush1.msra.mxu0 0.0
  %448 = vmatprep.subr.mxu0 0.0
  %449 = vmatpush1.msra.mxu0 0.0
  %450 = vmatprep.subr.mxu0 0.0
  %451 = vmatpush1.msra.mxu0 0.0
  %452 = vmatprep.subr.mxu0 0.0
  %453 = vmatpush1.msra.mxu0 0.0
  %454 = vmatprep.subr.mxu0 0.0
  %455 = vmatpush1.msra.mxu0 0.0
  %456 = vmatprep.subr.mxu0 0.0
  %457 = vmatpush1.msra.mxu0 0.0
  %458 = vmatprep.subr.mxu0 0.0
  %459 = vmatpush1.msra.mxu0 0.0
  %460 = vmatprep.subr.mxu0 0.0
  %461 = vmatpush1.msra.mxu0 0.0
  %462 = vmatprep.subr.mxu0 0.0
  %463 = vmatpush1.msra.mxu0 0.0
  %464 = vmatprep.subr.mxu0 0.0
  %465 = vmatpush1.msra.mxu0 0.0
  %466 = vmatprep.subr.mxu0 0.0
  %467 = vmatpush1.msra.mxu0 0.0
  %468 = vmatprep.subr.mxu0 0.0
  %469 = vmatpush1.msra.mxu0 0.0
  %470 = vmatprep.subr.mxu0 0.0
  %471 = vmatpush1.msra.mxu0 0.0
  %472 = vmatprep.subr.mxu0 0.0
  %473 = vmatpush1.msra.mxu0 0.0
  %474 = vmatprep.subr.mxu0 0.0
  %475 = vmatpush1.msra.mxu0 0.0
  %476 = vmatprep.subr.mxu0 0.0
  %477 = vmatpush1.msra.mxu0 0.0
  %478 = vmatprep.mubr.f32.mxu0 0.0
  %479 = vmatmul.mubr.f32.gmra.mrb[0].mxu0 %v409
  %v480 = vpop.f32.mrb[0].mxu0
  %v481 = vadd.f32 0.0, %v480
  %v482 = vpop.f32.mrb[0].mxu0
  %483 = vmatprep.mubr.f32.mxu0 0.0
  %484 = vmatmul.mubr.f32.gmra.mrb[0].mxu0 %v412
  %v485 = vpop.f32.mrb[0].mxu0
  %v486 = vadd.f32 0.0, %v485
  %v487 = vpop.f32.mrb[0].mxu0
  %488 = vdwg.mxu0
  %v489 = vld [vmem:[%s5 + $0x60] sm:$0xff]
  %v490 = vld [vmem:[%s5 + $0x68] sm:$0xff]
  %v491 = vld [vmem:[%s5 + $0x70] sm:$0xff]
  %v492 = vld [vmem:[%s5 + $0x78] sm:$0xff]
  %v494 = vsel %vm407, %v300, 0
  %v497 = vsel %vm407, %v301, 0
  %499 = vmatprep.subr.mxu0 0.0
  %500 = vmatpush1.msra.mxu0 %v489
  %501 = vmatprep.subr.mxu0 0.0
  %502 = vmatpush1.msra.mxu0 %v490
  %503 = vmatprep.subr.mxu0 0.0
  %504 = vmatpush1.msra.mxu0 %v491
  %505 = vmatprep.subr.mxu0 0.0
  %506 = vmatpush1.msra.mxu0 %v492
  %507 = vmatprep.subr.mxu0 0.0
  %508 = vmatpush1.msra.mxu0 0.0
  %509 = vmatprep.subr.mxu0 0.0
  %510 = vmatpush1.msra.mxu0 0.0
  %511 = vmatprep.subr.mxu0 0.0
  %512 = vmatpush1.msra.mxu0 0.0
  %513 = vmatprep.subr.mxu0 0.0
  %514 = vmatpush1.msra.mxu0 0.0
  %515 = vmatprep.subr.mxu0 0.0
  %516 = vmatpush1.msra.mxu0 0.0
  %517 = vmatprep.subr.mxu0 0.0
  %518 = vmatpush1.msra.mxu0 0.0
  %519 = vmatprep.subr.mxu0 0.0
  %520 = vmatpush1.msra.mxu0 0.0
  %521 = vmatprep.subr.mxu0 0.0
  %522 = vmatpush1.msra.mxu0 0.0
  %523 = vmatprep.subr.mxu0 0.0
  %524 = vmatpush1.msra.mxu0 0.0
  %525 = vmatprep.subr.mxu0 0.0
  %526 = vmatpush1.msra.mxu0 0.0
  %527 = vmatprep.subr.mxu0 0.0
  %528 = vmatpush1.msra.mxu0 0.0
  %529 = vmatprep.subr.mxu0 0.0
  %530 = vmatpush1.msra.mxu0 0.0
  %531 = vmatprep.subr.mxu0 0.0
  %532 = vmatpush1.msra.mxu0 0.0
  %533 = vmatprep.subr.mxu0 0.0
  %534 = vmatpush1.msra.mxu0 0.0
  %535 = vmatprep.subr.mxu0 0.0
  %536 = vmatpush1.msra.mxu0 0.0
  %537 = vmatprep.subr.mxu0 0.0
  %538 = vmatpush1.msra.mxu0 0.0
  %539 = vmatprep.subr.mxu0 0.0
  %540 = vmatpush1.msra.mxu0 0.0
  %541 = vmatprep.subr.mxu0 0.0
  %542 = vmatpush1.msra.mxu0 0.0
  %543 = vmatprep.subr.mxu0 0.0
  %544 = vmatpush1.msra.mxu0 0.0
  %545 = vmatprep.subr.mxu0 0.0
  %546 = vmatpush1.msra.mxu0 0.0
  %547 = vmatprep.subr.mxu0 0.0
  %548 = vmatpush1.msra.mxu0 0.0
  %549 = vmatprep.subr.mxu0 0.0
  %550 = vmatpush1.msra.mxu0 0.0
  %551 = vmatprep.subr.mxu0 0.0
  %552 = vmatpush1.msra.mxu0 0.0
  %553 = vmatprep.subr.mxu0 0.0
  %554 = vmatpush1.msra.mxu0 0.0
  %555 = vmatprep.subr.mxu0 0.0
  %556 = vmatpush1.msra.mxu0 0.0
  %557 = vmatprep.subr.mxu0 0.0
  %558 = vmatpush1.msra.mxu0 0.0
  %559 = vmatprep.subr.mxu0 0.0
  %560 = vmatpush1.msra.mxu0 0.0
  %561 = vmatprep.subr.mxu0 0.0
  %562 = vmatpush1.msra.mxu0 0.0
  %563 = vmatprep.mubr.f32.mxu0 0.0
  %564 = vmatmul.mubr.f32.gmra.mrb[0].mxu0 %v494
  %v565 = vpop.f32.mrb[0].mxu0
  %v566 = vadd.f32 0.0, %v565
  %v567 = vpop.f32.mrb[0].mxu0
  %568 = vmatprep.mubr.f32.mxu0 0.0
  %569 = vmatmul.mubr.f32.gmra.mrb[0].mxu0 %v497
  %v570 = vpop.f32.mrb[0].mxu0
  %v571 = vadd.f32 0.0, %v570
  %v572 = vpop.f32.mrb[0].mxu0
  %573 = vdwg.mxu0
  %576 = vrot.lane.b32.xlu0 %v566, 96
  %v577 = vpop.permute.xlu0 %576
  %578 = vrot.lane.b32.xlu0 %v571, 96
  %v579 = vpop.permute.xlu0 %578
  %582 = vmatprep.subr.mxu0 0.0
  %583 = vmatpush1.msra.mxu0 %v481
  %584 = vmatprep.subr.mxu0 0.0
  %585 = vmatpush1.msra.mxu0 %v486
  %586 = vmatprep.subr.mxu0 0.0
  %587 = vmatpush1.msra.mxu0 0.0
  %588 = vmatprep.subr.mxu0 0.0
  %589 = vmatpush1.msra.mxu0 0.0
  %590 = vmatprep.subr.mxu0 0.0
  %591 = vmatpush1.msra.mxu0 0.0
  %592 = vmatprep.subr.mxu0 0.0
  %593 = vmatpush1.msra.mxu0 0.0
  %594 = vmatprep.subr.mxu0 0.0
  %595 = vmatpush1.msra.mxu0 0.0
  %596 = vmatprep.subr.mxu0 0.0
  %597 = vmatpush1.msra.mxu0 0.0
  %598 = vmatprep.subr.mxu0 0.0
  %599 = vmatpush1.msra.mxu0 0.0
  %600 = vmatprep.subr.mxu0 0.0
  %601 = vmatpush1.msra.mxu0 0.0
  %602 = vmatprep.subr.mxu0 0.0
  %603 = vmatpush1.msra.mxu0 0.0
  %604 = vmatprep.subr.mxu0 0.0
  %605 = vmatpush1.msra.mxu0 0.0
  %606 = vmatprep.subr.mxu0 0.0
  %607 = vmatpush1.msra.mxu0 0.0
  %608 = vmatprep.subr.mxu0 0.0
  %609 = vmatpush1.msra.mxu0 0.0
  %610 = vmatprep.subr.mxu0 0.0
  %611 = vmatpush1.msra.mxu0 0.0
  %612 = vmatprep.subr.mxu0 0.0
  %613 = vmatpush1.msra.mxu0 0.0
  %614 = vmatprep.subr.mxu0 0.0
  %615 = vmatpush1.msra.mxu0 0.0
  %616 = vmatprep.subr.mxu0 0.0
  %617 = vmatpush1.msra.mxu0 0.0
  %618 = vmatprep.subr.mxu0 0.0
  %619 = vmatpush1.msra.mxu0 0.0
  %620 = vmatprep.subr.mxu0 0.0
  %621 = vmatpush1.msra.mxu0 0.0
  %622 = vmatprep.subr.mxu0 0.0
  %623 = vmatpush1.msra.mxu0 0.0
  %624 = vmatprep.subr.mxu0 0.0
  %625 = vmatpush1.msra.mxu0 0.0
  %626 = vmatprep.subr.mxu0 0.0
  %627 = vmatpush1.msra.mxu0 0.0
  %628 = vmatprep.subr.mxu0 0.0
  %629 = vmatpush1.msra.mxu0 0.0
  %630 = vmatprep.subr.mxu0 0.0
  %631 = vmatpush1.msra.mxu0 0.0
  %632 = vmatprep.subr.mxu0 0.0
  %633 = vmatpush1.msra.mxu0 0.0
  %634 = vmatprep.subr.mxu0 0.0
  %635 = vmatpush1.msra.mxu0 0.0
  %636 = vmatprep.subr.mxu0 0.0
  %637 = vmatpush1.msra.mxu0 0.0
  %638 = vmatprep.subr.mxu0 0.0
  %639 = vmatpush1.msra.mxu0 0.0
  %640 = vmatprep.subr.mxu0 0.0
  %641 = vmatpush1.msra.mxu0 0.0
  %642 = vmatprep.subr.mxu0 0.0
  %643 = vmatpush1.msra.mxu0 0.0
  %644 = vmatprep.subr.mxu0 0.0
  %645 = vmatpush1.msra.mxu0 0.0
  %646 = vmatprep.mubr.f32.mxu0 0.0
  %647 = vmatmul.mubr.f32.gmra.mrb[0].mxu0 %v214
  %v648 = vpop.f32.mrb[0].mxu0
  %v649 = vadd.f32 %v577, %v648
  %v650 = vpop.f32.mrb[0].mxu0
  %651 = vmatprep.mubr.f32.mxu0 0.0
  %652 = vmatmul.mubr.f32.gmra.mrb[0].mxu0 %v217
  %v653 = vpop.f32.mrb[0].mxu0
  %v654 = vadd.f32 %v579, %v653
  %v655 = vpop.f32.mrb[0].mxu0
  %656 = vdwg.mxu0
  %v657 = vlaneseq
  %v658 = vshrl.u32 %v657, 7
  %v659 = vsub.s32 2, %v658
  %v660 = vrot.slane %v31, %v659
  %v661 = vadd.f32 %v649, %v660
  %v662 = vadd.f32 %v654, %v660
  %665 = vrot.lane.b32.xlu0 %v481, 96
  %v666 = vpop.permute.xlu0 %665
  %667 = vrot.lane.b32.xlu0 %v486, 96
  %v668 = vpop.permute.xlu0 %667
  %v671 = vsel %vm317, %v571, 0
  %673 = vmatprep.subr.mxu0 0.0
  %674 = vmatpush1.msra.mxu0 %v566
  %675 = vmatprep.subr.mxu0 0.0
  %676 = vmatpush1.msra.mxu0 %v671
  %677 = vmatprep.subr.mxu0 0.0
  %678 = vmatpush1.msra.mxu0 0.0
  %679 = vmatprep.subr.mxu0 0.0
  %680 = vmatpush1.msra.mxu0 0.0
  %681 = vmatprep.subr.mxu0 0.0
  %682 = vmatpush1.msra.mxu0 0.0
  %683 = vmatprep.subr.mxu0 0.0
  %684 = vmatpush1.msra.mxu0 0.0
  %685 = vmatprep.subr.mxu0 0.0
  %686 = vmatpush1.msra.mxu0 0.0
  %687 = vmatprep.subr.mxu0 0.0
  %688 = vmatpush1.msra.mxu0 0.0
  %689 = vmatprep.subr.mxu0 0.0
  %690 = vmatpush1.msra.mxu0 0.0
  %691 = vmatprep.subr.mxu0 0.0
  %692 = vmatpush1.msra.mxu0 0.0
  %693 = vmatprep.subr.mxu0 0.0
  %694 = vmatpush1.msra.mxu0 0.0
  %695 = vmatprep.subr.mxu0 0.0
  %696 = vmatpush1.msra.mxu0 0.0
  %697 = vmatprep.subr.mxu0 0.0
  %698 = vmatpush1.msra.mxu0 0.0
  %699 = vmatprep.subr.mxu0 0.0
  %700 = vmatpush1.msra.mxu0 0.0
  %701 = vmatprep.subr.mxu0 0.0
  %702 = vmatpush1.msra.mxu0 0.0
  %703 = vmatprep.subr.mxu0 0.0
  %704 = vmatpush1.msra.mxu0 0.0
  %705 = vmatprep.subr.mxu0 0.0
  %706 = vmatpush1.msra.mxu0 0.0
  %707 = vmatprep.subr.mxu0 0.0
  %708 = vmatpush1.msra.mxu0 0.0
  %709 = vmatprep.subr.mxu0 0.0
  %710 = vmatpush1.msra.mxu0 0.0
  %711 = vmatprep.subr.mxu0 0.0
  %712 = vmatpush1.msra.mxu0 0.0
  %713 = vmatprep.subr.mxu0 0.0
  %714 = vmatpush1.msra.mxu0 0.0
  %715 = vmatprep.subr.mxu0 0.0
  %716 = vmatpush1.msra.mxu0 0.0
  %717 = vmatprep.subr.mxu0 0.0
  %718 = vmatpush1.msra.mxu0 0.0
  %719 = vmatprep.subr.mxu0 0.0
  %720 = vmatpush1.msra.mxu0 0.0
  %721 = vmatprep.subr.mxu0 0.0
  %722 = vmatpush1.msra.mxu0 0.0
  %723 = vmatprep.subr.mxu0 0.0
  %724 = vmatpush1.msra.mxu0 0.0
  %725 = vmatprep.subr.mxu0 0.0
  %726 = vmatpush1.msra.mxu0 0.0
  %727 = vmatprep.subr.mxu0 0.0
  %728 = vmatpush1.msra.mxu0 0.0
  %729 = vmatprep.subr.mxu0 0.0
  %730 = vmatpush1.msra.mxu0 0.0
  %731 = vmatprep.subr.mxu0 0.0
  %732 = vmatpush1.msra.mxu0 0.0
  %733 = vmatprep.subr.mxu0 0.0
  %734 = vmatpush1.msra.mxu0 0.0
  %735 = vmatprep.subr.mxu0 0.0
  %736 = vmatpush1.msra.mxu0 0.0
  %737 = vmatprep.mubr.f32.mxu0 0.0
  %738 = vmatmul.mubr.f32.gmra.mrb[0].mxu0 %v312
  %v739 = vpop.f32.mrb[0].mxu0
  %v740 = vadd.f32 %v666, %v739
  %v741 = vpop.f32.mrb[0].mxu0
  %742 = vmatprep.mubr.f32.mxu0 0.0
  %743 = vmatmul.mubr.f32.gmra.mrb[0].mxu0 %v315
  %v744 = vpop.f32.mrb[0].mxu0
  %v745 = vadd.f32 %v668, %v744
  %v746 = vpop.f32.mrb[0].mxu0
  %747 = vdwg.mxu0
  %v748 = vlaneseq
  %v749 = vshrl.u32 %v748, 7
  %v750 = vsub.s32 3, %v749
  %v751 = vrot.slane %v31, %v750
  %v752 = vadd.f32 %v740, %v751
  %v753 = vadd.f32 %v745, %v751
  %v754 = vld [vmem:[%s4] sm:$0xff]
  %vm755 = vcmask 228352
  %v757 = vsel %vm755, %v754, 0
  %v760 = vsel %vm317, %v662, 0
  %762 = vmatprep.subr.mxu0 0.0
  %763 = vmatpush1.msra.mxu0 %v752
  %764 = vmatprep.subr.mxu0 0.0
  %765 = vmatpush1.msra.mxu0 %v753
  %766 = vmatprep.subr.mxu0 0.0
  %767 = vmatpush1.msra.mxu0 %v661
  %768 = vmatprep.subr.mxu0 0.0
  %769 = vmatpush1.msra.mxu0 %v760
  %770 = vmatprep.subr.mxu0 0.0
  %771 = vmatpush1.msra.mxu0 0.0
  %772 = vmatprep.subr.mxu0 0.0
  %773 = vmatpush1.msra.mxu0 0.0
  %774 = vmatprep.subr.mxu0 0.0
  %775 = vmatpush1.msra.mxu0 0.0
  %776 = vmatprep.subr.mxu0 0.0
  %777 = vmatpush1.msra.mxu0 0.0
  %778 = vmatprep.subr.mxu0 0.0
  %779 = vmatpush1.msra.mxu0 0.0
  %780 = vmatprep.subr.mxu0 0.0
  %781 = vmatpush1.msra.mxu0 0.0
  %782 = vmatprep.subr.mxu0 0.0
  %783 = vmatpush1.msra.mxu0 0.0
  %784 = vmatprep.subr.mxu0 0.0
  %785 = vmatpush1.msra.mxu0 0.0
  %786 = vmatprep.subr.mxu0 0.0
  %787 = vmatpush1.msra.mxu0 0.0
  %788 = vmatprep.subr.mxu0 0.0
  %789 = vmatpush1.msra.mxu0 0.0
  %790 = vmatprep.subr.mxu0 0.0
  %791 = vmatpush1.msra.mxu0 0.0
  %792 = vmatprep.subr.mxu0 0.0
  %793 = vmatpush1.msra.mxu0 0.0
  %794 = vmatprep.subr.mxu0 0.0
  %795 = vmatpush1.msra.mxu0 0.0
  %796 = vmatprep.subr.mxu0 0.0
  %797 = vmatpush1.msra.mxu0 0.0
  %798 = vmatprep.subr.mxu0 0.0
  %799 = vmatpush1.msra.mxu0 0.0
  %800 = vmatprep.subr.mxu0 0.0
  %801 = vmatpush1.msra.mxu0 0.0
  %802 = vmatprep.subr.mxu0 0.0
  %803 = vmatpush1.msra.mxu0 0.0
  %804 = vmatprep.subr.mxu0 0.0
  %805 = vmatpush1.msra.mxu0 0.0
  %806 = vmatprep.subr.mxu0 0.0
  %807 = vmatpush1.msra.mxu0 0.0
  %808 = vmatprep.subr.mxu0 0.0
  %809 = vmatpush1.msra.mxu0 0.0
  %810 = vmatprep.subr.mxu0 0.0
  %811 = vmatpush1.msra.mxu0 0.0
  %812 = vmatprep.subr.mxu0 0.0
  %813 = vmatpush1.msra.mxu0 0.0
  %814 = vmatprep.subr.mxu0 0.0
  %815 = vmatpush1.msra.mxu0 0.0
  %816 = vmatprep.subr.mxu0 0.0
  %817 = vmatpush1.msra.mxu0 0.0
  %818 = vmatprep.subr.mxu0 0.0
  %819 = vmatpush1.msra.mxu0 0.0
  %820 = vmatprep.subr.mxu0 0.0
  %821 = vmatpush1.msra.mxu0 0.0
  %822 = vmatprep.subr.mxu0 0.0
  %823 = vmatpush1.msra.mxu0 0.0
  %824 = vmatprep.subr.mxu0 0.0
  %825 = vmatpush1.msra.mxu0 0.0
  %826 = vmatprep.mubr.f32.mxu0 0.0
  %827 = vmatmul.mubr.f32.gmra.mrb[0].mxu0 %v757
  %v828 = vpop.f32.mrb[0].mxu0
  %v829 = vadd.f32 0.0, %v828
  %v830 = vpop.f32.mrb[0].mxu0
  %831 = vdwg.mxu0
  %v832 = vmax.f32 %v829, 0.0
  %v833 = vld [vmem:[%s5 + $0x88] sm:$0xff]
  %v834 = vld [vmem:[%s5 + $0x90] sm:$0xff]
  %v835 = vld [vmem:[%s5 + $0x98] sm:$0xff]
  %v836 = vld [vmem:[%s5 + $0xa0] sm:$0xff]
  %v837 = vld [vmem:[%s5 + $0xa8] sm:$0x1]
  %v838 = vlaneseq
  %v839 = vshrl.u32 %v838, 7
  %v840 = vsub.s32 0, %v839
  %v841 = vrot.slane %v837, %v840
  %v843 = vsel %vm407, %v832, 0
  %845 = vmatprep.subr.mxu0 0.0
  %846 = vmatpush1.msra.mxu0 %v833
  %847 = vmatprep.subr.mxu0 0.0
  %848 = vmatpush1.msra.mxu0 %v834
  %849 = vmatprep.subr.mxu0 0.0
  %850 = vmatpush1.msra.mxu0 %v835
  %851 = vmatprep.subr.mxu0 0.0
  %852 = vmatpush1.msra.mxu0 %v836
  %853 = vmatprep.subr.mxu0 0.0
  %854 = vmatpush1.msra.mxu0 0.0
  %855 = vmatprep.subr.mxu0 0.0
  %856 = vmatpush1.msra.mxu0 0.0
  %857 = vmatprep.subr.mxu0 0.0
  %858 = vmatpush1.msra.mxu0 0.0
  %859 = vmatprep.subr.mxu0 0.0
  %860 = vmatpush1.msra.mxu0 0.0
  %861 = vmatprep.subr.mxu0 0.0
  %862 = vmatpush1.msra.mxu0 0.0
  %863 = vmatprep.subr.mxu0 0.0
  %864 = vmatpush1.msra.mxu0 0.0
  %865 = vmatprep.subr.mxu0 0.0
  %866 = vmatpush1.msra.mxu0 0.0
  %867 = vmatprep.subr.mxu0 0.0
  %868 = vmatpush1.msra.mxu0 0.0
  %869 = vmatprep.subr.mxu0 0.0
  %870 = vmatpush1.msra.mxu0 0.0
  %871 = vmatprep.subr.mxu0 0.0
  %872 = vmatpush1.msra.mxu0 0.0
  %873 = vmatprep.subr.mxu0 0.0
  %874 = vmatpush1.msra.mxu0 0.0
  %875 = vmatprep.subr.mxu0 0.0
  %876 = vmatpush1.msra.mxu0 0.0
  %877 = vmatprep.subr.mxu0 0.0
  %878 = vmatpush1.msra.mxu0 0.0
  %879 = vmatprep.subr.mxu0 0.0
  %880 = vmatpush1.msra.mxu0 0.0
  %881 = vmatprep.subr.mxu0 0.0
  %882 = vmatpush1.msra.mxu0 0.0
  %883 = vmatprep.subr.mxu0 0.0
  %884 = vmatpush1.msra.mxu0 0.0
  %885 = vmatprep.subr.mxu0 0.0
  %886 = vmatpush1.msra.mxu0 0.0
  %887 = vmatprep.subr.mxu0 0.0
  %888 = vmatpush1.msra.mxu0 0.0
  %889 = vmatprep.subr.mxu0 0.0
  %890 = vmatpush1.msra.mxu0 0.0
  %891 = vmatprep.subr.mxu0 0.0
  %892 = vmatpush1.msra.mxu0 0.0
  %893 = vmatprep.subr.mxu0 0.0
  %894 = vmatpush1.msra.mxu0 0.0
  %895 = vmatprep.subr.mxu0 0.0
  %896 = vmatpush1.msra.mxu0 0.0
  %897 = vmatprep.subr.mxu0 0.0
  %898 = vmatpush1.msra.mxu0 0.0
  %899 = vmatprep.subr.mxu0 0.0
  %900 = vmatpush1.msra.mxu0 0.0
  %901 = vmatprep.subr.mxu0 0.0
  %902 = vmatpush1.msra.mxu0 0.0
  %903 = vmatprep.subr.mxu0 0.0
  %904 = vmatpush1.msra.mxu0 0.0
  %905 = vmatprep.subr.mxu0 0.0
  %906 = vmatpush1.msra.mxu0 0.0
  %907 = vmatprep.subr.mxu0 0.0
  %908 = vmatpush1.msra.mxu0 0.0
  %909 = vmatprep.mubr.f32.mxu0 0.0
  %910 = vmatmul.mubr.f32.gmra.mrb[0].mxu0 %v843
  %v911 = vpop.f32.mrb[0].mxu0
  %v912 = vadd.f32 %v841, %v911
  %v913 = vpop.f32.mrb[0].mxu0
  %914 = vdwg.mxu0
  %915 = vst [vmem:[%s6] sm:$0xff] %v912
  // Predicated region
  $region26: #{model_forward.1} parent=0 // pred_check
    _
  $region27: #{model_forward.1} parent=0 // pred_check_branch
    %917 = sbr.rel (0) target = $region29
  $region28: #{model_forward.1} parent=0 // pred_region
    _
  $region29: #{model_forward.1} parent=0 // pred_fallthru
    _
  // Predicated region
  $region30: #{model_forward.1} parent=0 // pred_check
    _
  $region31: #{model_forward.1} parent=0 // pred_check_branch
    %919 = sbr.rel (0) target = $region33
  $region32: #{model_forward.1} parent=0 // pred_region
    _
  $region33: #{model_forward.1} parent=0 // pred_fallthru
    _

</llo_original>
